<compile_context>
chip_gen: v5e
topology: v5e:2x2
jax: 0.10.0
libtpu: 0.0.40
codegen_flags: <defaults>
</compile_context>

<pallas_src>
import jax
import jax.numpy as jnp
from jax.experimental import pallas as pl
from jax.experimental.pallas import tpu as pltpu


def _spectral_mul_kernel(xr_ref, xi_ref, wr_ref, wi_ref, or_ref, oi_ref):
    # Blocks:
    #   xr/xi : (tci, tb, Mpad)   a chunk of input channels, a batch tile
    #   wr/wi : (tci, to, Mpad)   same channel chunk, an out-channel tile
    #   or/oi : (tb, to, Mpad)    f32 output, resident across the Ci grid axis
    ci = pl.program_id(2)
    tci, tb, mpad = xr_ref.shape
    to = wr_ref.shape[1]

    # Out-channel sub-chunk (<= 8 sublanes): keeps per-iteration temporaries
    # small instead of materializing / spilling full (tb, to, Mpad) products.
    osub = max(t for t in range(1, min(8, to) + 1) if to % t == 0)

    for s in range(to // osub):                      # static, small
        osl = pl.ds(s * osub, osub)
        acc_r = jnp.zeros((tb, osub, mpad), jnp.float32)
        acc_i = jnp.zeros((tb, osub, mpad), jnp.float32)

        for c in range(tci):                         # static, tci <= 16
            xr = xr_ref[c][:, None, :]               # (tb, 1, Mpad)
            xi = xi_ref[c][:, None, :]
            wr = wr_ref[c, osl, :][None, :, :]       # (1, osub, Mpad)
            wi = wi_ref[c, osl, :][None, :, :]
            # 4-multiply complex product, fused straight into the accumulators.
            acc_r = acc_r + (xr * wr - xi * wi)
            acc_i = acc_i + (xr * wi + xi * wr)

        @pl.when(ci == 0)
        def _():
            or_ref[:, osl, :] = acc_r
            oi_ref[:, osl, :] = acc_i

        @pl.when(ci > 0)
        def _():
            or_ref[:, osl, :] += acc_r
            oi_ref[:, osl, :] += acc_i


def _tile_candidates(dim, target):
    """Valid tile sizes for a sublane-constrained axis: multiples of 8 that
    divide `dim`, plus the full dim.  Returned descending, starting at the
    largest candidate <= target (or the smallest candidate if none fits)."""
    cands = sorted({t for t in range(8, dim, 8) if dim % t == 0} | {dim})
    fitting = [t for t in cands if t <= target]
    start = fitting[-1] if fitting else cands[0]
    return [t for t in reversed(cands) if t <= start]


def _choose_tiles(B, Ci, Co, Mpad):
    """Pick (tb, to, tci) against a ~20 MiB resident-VMEM budget."""
    tci = Ci if Ci <= 16 else _tile_candidates(Ci, 16)[0]
    tb_c = _tile_candidates(B, 64)
    to_c = _tile_candidates(Co, 128)
    bi = oi = 0

    def footprint(tb, to):
        x = 2 * 2 * tci * tb * Mpad * 4      # xr, xi (double-buffered)
        w = 2 * 2 * tci * to * Mpad * 4      # wr, wi (double-buffered)
        o = 2 * 2 * tb * to * Mpad * 4       # out_r, out_i (+ headroom)
        return x + w + o

    budget = 20 * 1024 * 1024
    while footprint(tb_c[bi], to_c[oi]) > budget:
        if tb_c[bi] >= to_c[oi] and bi + 1 < len(tb_c):
            bi += 1
        elif oi + 1 < len(to_c):
            oi += 1
        elif bi + 1 < len(tb_c):
            bi += 1
        else:
            break

    # v7x has 2 TensorCores sharing the "parallel" grid axes: if the whole
    # problem landed in a single (b, o) block, split Cout once so both work.
    if (B // tb_c[bi] == 1 and Co // to_c[oi] == 1 and Co >= 16
            and oi + 1 < len(to_c)):
        oi += 1
    return tb_c[bi], to_c[oi], tci


def _spectral_mul(xr, xi, wr, wi):
    """out[b,o,m] = sum_i x[i,b,m] * w[i,o,m]  (complex, split real/imag).

    xr, xi : (Ci, B, Mpad)  f32
    wr, wi : (Ci, Co, Mpad) f32
    returns (out_r, out_i) : (B, Co, Mpad) f32
    """
    Ci, B, Mpad = xr.shape
    Co = wr.shape[1]
    tb, to, tci = _choose_tiles(B, Ci, Co, Mpad)
    grid = (B // tb, Co // to, Ci // tci)

    x_spec = pl.BlockSpec((tci, tb, Mpad), lambda b, o, i: (i, b, 0))
    # Weight index_map ignores the batch grid index; with the whole Ci chunk
    # folded into the block this only re-DMAs when the (i, o) block changes.
    w_spec = pl.BlockSpec((tci, to, Mpad), lambda b, o, i: (i, o, 0))
    o_spec = pl.BlockSpec((tb, to, Mpad), lambda b, o, i: (b, o, 0))

    flops = 8 * B * Ci * Co * Mpad
    bytes_accessed = 4 * Mpad * (2 * Ci * B + 2 * Ci * Co + 2 * B * Co)

    return pl.pallas_call(
        _spectral_mul_kernel,
        out_shape=(jax.ShapeDtypeStruct((B, Co, Mpad), jnp.float32),
                   jax.ShapeDtypeStruct((B, Co, Mpad), jnp.float32)),
        grid_spec=pltpu.PrefetchScalarGridSpec(
            num_scalar_prefetch=0,
            grid=grid,
            in_specs=[x_spec, x_spec, w_spec, w_spec],
            out_specs=(o_spec, o_spec)),
        compiler_params=pltpu.CompilerParams(
            dimension_semantics=("parallel", "parallel", "arbitrary"),
            vmem_limit_bytes=48 * 1024 * 1024),
        cost_estimate=pl.CostEstimate(
            flops=flops, transcendentals=0, bytes_accessed=bytes_accessed),
    )(xr, xi, wr, wi)


def spectral_conv2d_fast(x, weights1, weights2, modes1, modes2):
    """Forward pass matching SpectralConv2d_fast.forward.

    x: (B, Cin, H, W) float32
    weights1/weights2: (Cin, Cout, modes1, modes2) complex64
    returns: (B, Cout, H, W) float32
    """
    B, Cin, H, W = x.shape
    Cout = weights1.shape[1]
    Wr = W // 2 + 1

    x_ft = jnp.fft.rfft2(x)  # (B, Cin, H, Wr) complex64

    # Fuse the two mode corners along the modes1 axis -> one kernel call.
    # (If 2*modes1 > H the corners overlap; the write order below matches the
    #  PyTorch reference, so behavior is identical.)
    x_modes = jnp.concatenate(
        [x_ft[:, :, :modes1, :modes2], x_ft[:, :, H - modes1:, :modes2]],
        axis=2)                                               # (B, Ci, 2*m1, m2)
    w_modes = jnp.concatenate([weights1, weights2], axis=2)   # (Ci, Co, 2*m1, m2)

    M = 2 * modes1 * modes2
    Mpad = ((M + 127) // 128) * 128          # lane-dense flattened mode axis

    def pad_m(a):
        if Mpad == M:
            return a
        return jnp.pad(a, [(0, 0)] * (a.ndim - 1) + [(0, Mpad - M)])

    # TODO(synk): real/imag split uses jnp.real/jnp.imag; a complex64 bitcast
    #             is not reliably supported, so the de-interleave stays in XLA.
    xr = pad_m(jnp.transpose(
        jnp.real(x_modes).reshape(B, Cin, M), (1, 0, 2))).astype(jnp.float32)
    xi = pad_m(jnp.transpose(
        jnp.imag(x_modes).reshape(B, Cin, M), (1, 0, 2))).astype(jnp.float32)
    wr = pad_m(jnp.real(w_modes).reshape(Cin, Cout, M)).astype(jnp.float32)
    wi = pad_m(jnp.imag(w_modes).reshape(Cin, Cout, M)).astype(jnp.float32)

    out_r, out_i = _spectral_mul(xr, xi, wr, wi)

    out_r = out_r[..., :M].reshape(B, Cout, 2 * modes1, modes2)
    out_i = out_i[..., :M].reshape(B, Cout, 2 * modes1, modes2)
    out_modes = (out_r + 1j * out_i).astype(jnp.complex64)

    out_ft = jnp.zeros((B, Cout, H, Wr), dtype=jnp.complex64)
    out_ft = out_ft.at[:, :, :modes1, :modes2].set(out_modes[:, :, :modes1])
    out_ft = out_ft.at[:, :, H - modes1:, :modes2].set(out_modes[:, :, modes1:])

    return jnp.fft.irfft2(out_ft, s=(H, W))


def _reference(x, weights1, weights2, modes1, modes2):
    """Pure-JAX reference mirroring the PyTorch module."""
    B, Cin, H, W = x.shape
    Cout = weights1.shape[1]
    Wr = W // 2 + 1
    x_ft = jnp.fft.rfft2(x)
    out_ft = jnp.zeros((B, Cout, H, Wr), dtype=jnp.complex64)
    out_ft = out_ft.at[:, :, :modes1, :modes2].set(
        jnp.einsum('bixy,ioxy->boxy', x_ft[:, :, :modes1, :modes2], weights1))
    out_ft = out_ft.at[:, :, H - modes1:, :modes2].set(
        jnp.einsum('bixy,ioxy->boxy', x_ft[:, :, -modes1:, :modes2], weights2))
    return jnp.fft.irfft2(out_ft, s=(H, W))


if __name__ == "__main__":
    B, Cin, Cout, H, W = 2, 4, 4, 16, 16
    modes1, modes2 = 6, 6

    key = jax.random.PRNGKey(0)
    kx, kw1r, kw1i, kw2r, kw2i = jax.random.split(key, 5)

    x = jax.random.normal(kx, (B, Cin, H, W), dtype=jnp.float32)

    scale = 1.0 / (Cin * Cout)
    # torch.rand(..., dtype=cfloat): uniform [0,1) real and imag parts.
    w1 = scale * (jax.random.uniform(kw1r, (Cin, Cout, modes1, modes2))
                  + 1j * jax.random.uniform(kw1i, (Cin, Cout, modes1, modes2)))
    w2 = scale * (jax.random.uniform(kw2r, (Cin, Cout, modes1, modes2))
                  + 1j * jax.random.uniform(kw2i, (Cin, Cout, modes1, modes2)))
    w1 = w1.astype(jnp.complex64)
    w2 = w2.astype(jnp.complex64)

    fwd = jax.jit(spectral_conv2d_fast, static_argnums=(3, 4))
    out = jax.block_until_ready(fwd(x, w1, w2, modes1, modes2))

    ref = jax.block_until_ready(_reference(x, w1, w2, modes1, modes2))
    assert out.shape == (B, Cout, H, W)
    assert jnp.allclose(out, ref, atol=1e-5, rtol=1e-4), (
        float(jnp.max(jnp.abs(out - ref))))

    print("KERNEL_OK")
</pallas_src>

<mosaic_0001>
module attributes {stable_mosaic.version = 11 : i64} {
  func.func @_spectral_mul_kernel(%arg0: i32, %arg1: i32, %arg2: i32, %arg3: memref<4x2x128xf32, #tpu.memory_space<vmem>>, %arg4: memref<4x2x128xf32, #tpu.memory_space<vmem>>, %arg5: memref<4x4x128xf32, #tpu.memory_space<vmem>>, %arg6: memref<4x4x128xf32, #tpu.memory_space<vmem>>, %arg7: memref<2x4x128xf32, #tpu.memory_space<vmem>>, %arg8: memref<2x4x128xf32, #tpu.memory_space<vmem>>) attributes {dimension_semantics = [#tpu.dimension_semantics<parallel>, #tpu.dimension_semantics<parallel>, #tpu.dimension_semantics<arbitrary>], iteration_bounds = array<i64: 1, 1, 1>, scalar_prefetch = 0 : i64, scratch_operands = 0 : i64, tpu.core_type = #tpu.core_type<tc>, window_params = [{transform_indices = @transform_0, window_bounds = array<i64: 4, 2, 128>}, {transform_indices = @transform_1, window_bounds = array<i64: 4, 2, 128>}, {transform_indices = @transform_2, window_bounds = array<i64: 4, 4, 128>}, {transform_indices = @transform_3, window_bounds = array<i64: 4, 4, 128>}, {transform_indices = @transform_4, window_bounds = array<i64: 2, 4, 128>}, {transform_indices = @transform_5, window_bounds = array<i64: 2, 4, 128>}]} {
    %cst = arith.constant 0.000000e+00 : f32
    %0 = vector.broadcast %cst : f32 to vector<2x4x128xf32>
    %cst_0 = arith.constant 0.000000e+00 : f32
    %1 = vector.broadcast %cst_0 : f32 to vector<2x4x128xf32>
    %c0 = arith.constant 0 : index
    %c0_1 = arith.constant 0 : index
    %c0_2 = arith.constant 0 : index
    %2 = vector.load %arg3[%c0, %c0_1, %c0_2] : memref<4x2x128xf32, #tpu.memory_space<vmem>>, vector<1x2x128xf32>
    %3 = vector.shape_cast %2 : vector<1x2x128xf32> to vector<2x128xf32>
    %4 = vector.shape_cast %3 : vector<2x128xf32> to vector<2x1x128xf32>
    %c0_3 = arith.constant 0 : index
    %c0_4 = arith.constant 0 : index
    %c0_5 = arith.constant 0 : index
    %5 = vector.load %arg4[%c0_3, %c0_4, %c0_5] : memref<4x2x128xf32, #tpu.memory_space<vmem>>, vector<1x2x128xf32>
    %6 = vector.shape_cast %5 : vector<1x2x128xf32> to vector<2x128xf32>
    %7 = vector.shape_cast %6 : vector<2x128xf32> to vector<2x1x128xf32>
    %c0_6 = arith.constant 0 : index
    %c0_7 = arith.constant 0 : index
    %c0_8 = arith.constant 0 : index
    %8 = vector.load %arg5[%c0_6, %c0_7, %c0_8] : memref<4x4x128xf32, #tpu.memory_space<vmem>>, vector<1x4x128xf32>
    %9 = vector.shape_cast %8 : vector<1x4x128xf32> to vector<4x128xf32>
    %10 = vector.shape_cast %9 : vector<4x128xf32> to vector<1x4x128xf32>
    %c0_9 = arith.constant 0 : index
    %c0_10 = arith.constant 0 : index
    %c0_11 = arith.constant 0 : index
    %11 = vector.load %arg6[%c0_9, %c0_10, %c0_11] : memref<4x4x128xf32, #tpu.memory_space<vmem>>, vector<1x4x128xf32>
    %12 = vector.shape_cast %11 : vector<1x4x128xf32> to vector<4x128xf32>
    %13 = vector.shape_cast %12 : vector<4x128xf32> to vector<1x4x128xf32>
    %14 = vector.broadcast %4 : vector<2x1x128xf32> to vector<2x4x128xf32>
    %15 = vector.broadcast %10 : vector<1x4x128xf32> to vector<2x4x128xf32>
    %16 = arith.mulf %14, %15 : vector<2x4x128xf32>
    %17 = vector.broadcast %7 : vector<2x1x128xf32> to vector<2x4x128xf32>
    %18 = vector.broadcast %13 : vector<1x4x128xf32> to vector<2x4x128xf32>
    %19 = arith.mulf %17, %18 : vector<2x4x128xf32>
    %20 = arith.subf %16, %19 : vector<2x4x128xf32>
    %21 = arith.addf %0, %20 : vector<2x4x128xf32>
    %22 = vector.broadcast %4 : vector<2x1x128xf32> to vector<2x4x128xf32>
    %23 = vector.broadcast %13 : vector<1x4x128xf32> to vector<2x4x128xf32>
    %24 = arith.mulf %22, %23 : vector<2x4x128xf32>
    %25 = vector.broadcast %7 : vector<2x1x128xf32> to vector<2x4x128xf32>
    %26 = vector.broadcast %10 : vector<1x4x128xf32> to vector<2x4x128xf32>
    %27 = arith.mulf %25, %26 : vector<2x4x128xf32>
    %28 = arith.addf %24, %27 : vector<2x4x128xf32>
    %29 = arith.addf %1, %28 : vector<2x4x128xf32>
    %c1 = arith.constant 1 : index
    %c0_12 = arith.constant 0 : index
    %c0_13 = arith.constant 0 : index
    %30 = vector.load %arg3[%c1, %c0_12, %c0_13] : memref<4x2x128xf32, #tpu.memory_space<vmem>>, vector<1x2x128xf32>
    %31 = vector.shape_cast %30 : vector<1x2x128xf32> to vector<2x128xf32>
    %32 = vector.shape_cast %31 : vector<2x128xf32> to vector<2x1x128xf32>
    %c1_14 = arith.constant 1 : index
    %c0_15 = arith.constant 0 : index
    %c0_16 = arith.constant 0 : index
    %33 = vector.load %arg4[%c1_14, %c0_15, %c0_16] : memref<4x2x128xf32, #tpu.memory_space<vmem>>, vector<1x2x128xf32>
    %34 = vector.shape_cast %33 : vector<1x2x128xf32> to vector<2x128xf32>
    %35 = vector.shape_cast %34 : vector<2x128xf32> to vector<2x1x128xf32>
    %c1_17 = arith.constant 1 : index
    %c0_18 = arith.constant 0 : index
    %c0_19 = arith.constant 0 : index
    %36 = vector.load %arg5[%c1_17, %c0_18, %c0_19] : memref<4x4x128xf32, #tpu.memory_space<vmem>>, vector<1x4x128xf32>
    %37 = vector.shape_cast %36 : vector<1x4x128xf32> to vector<4x128xf32>
    %38 = vector.shape_cast %37 : vector<4x128xf32> to vector<1x4x128xf32>
    %c1_20 = arith.constant 1 : index
    %c0_21 = arith.constant 0 : index
    %c0_22 = arith.constant 0 : index
    %39 = vector.load %arg6[%c1_20, %c0_21, %c0_22] : memref<4x4x128xf32, #tpu.memory_space<vmem>>, vector<1x4x128xf32>
    %40 = vector.shape_cast %39 : vector<1x4x128xf32> to vector<4x128xf32>
    %41 = vector.shape_cast %40 : vector<4x128xf32> to vector<1x4x128xf32>
    %42 = vector.broadcast %32 : vector<2x1x128xf32> to vector<2x4x128xf32>
    %43 = vector.broadcast %38 : vector<1x4x128xf32> to vector<2x4x128xf32>
    %44 = arith.mulf %42, %43 : vector<2x4x128xf32>
    %45 = vector.broadcast %35 : vector<2x1x128xf32> to vector<2x4x128xf32>
    %46 = vector.broadcast %41 : vector<1x4x128xf32> to vector<2x4x128xf32>
    %47 = arith.mulf %45, %46 : vector<2x4x128xf32>
    %48 = arith.subf %44, %47 : vector<2x4x128xf32>
    %49 = arith.addf %21, %48 : vector<2x4x128xf32>
    %50 = vector.broadcast %32 : vector<2x1x128xf32> to vector<2x4x128xf32>
    %51 = vector.broadcast %41 : vector<1x4x128xf32> to vector<2x4x128xf32>
    %52 = arith.mulf %50, %51 : vector<2x4x128xf32>
    %53 = vector.broadcast %35 : vector<2x1x128xf32> to vector<2x4x128xf32>
    %54 = vector.broadcast %38 : vector<1x4x128xf32> to vector<2x4x128xf32>
    %55 = arith.mulf %53, %54 : vector<2x4x128xf32>
    %56 = arith.addf %52, %55 : vector<2x4x128xf32>
    %57 = arith.addf %29, %56 : vector<2x4x128xf32>
    %c2 = arith.constant 2 : index
    %c0_23 = arith.constant 0 : index
    %c0_24 = arith.constant 0 : index
    %58 = vector.load %arg3[%c2, %c0_23, %c0_24] : memref<4x2x128xf32, #tpu.memory_space<vmem>>, vector<1x2x128xf32>
    %59 = vector.shape_cast %58 : vector<1x2x128xf32> to vector<2x128xf32>
    %60 = vector.shape_cast %59 : vector<2x128xf32> to vector<2x1x128xf32>
    %c2_25 = arith.constant 2 : index
    %c0_26 = arith.constant 0 : index
    %c0_27 = arith.constant 0 : index
    %61 = vector.load %arg4[%c2_25, %c0_26, %c0_27] : memref<4x2x128xf32, #tpu.memory_space<vmem>>, vector<1x2x128xf32>
    %62 = vector.shape_cast %61 : vector<1x2x128xf32> to vector<2x128xf32>
    %63 = vector.shape_cast %62 : vector<2x128xf32> to vector<2x1x128xf32>
    %c2_28 = arith.constant 2 : index
    %c0_29 = arith.constant 0 : index
    %c0_30 = arith.constant 0 : index
    %64 = vector.load %arg5[%c2_28, %c0_29, %c0_30] : memref<4x4x128xf32, #tpu.memory_space<vmem>>, vector<1x4x128xf32>
    %65 = vector.shape_cast %64 : vector<1x4x128xf32> to vector<4x128xf32>
    %66 = vector.shape_cast %65 : vector<4x128xf32> to vector<1x4x128xf32>
    %c2_31 = arith.constant 2 : index
    %c0_32 = arith.constant 0 : index
    %c0_33 = arith.constant 0 : index
    %67 = vector.load %arg6[%c2_31, %c0_32, %c0_33] : memref<4x4x128xf32, #tpu.memory_space<vmem>>, vector<1x4x128xf32>
    %68 = vector.shape_cast %67 : vector<1x4x128xf32> to vector<4x128xf32>
    %69 = vector.shape_cast %68 : vector<4x128xf32> to vector<1x4x128xf32>
    %70 = vector.broadcast %60 : vector<2x1x128xf32> to vector<2x4x128xf32>
    %71 = vector.broadcast %66 : vector<1x4x128xf32> to vector<2x4x128xf32>
    %72 = arith.mulf %70, %71 : vector<2x4x128xf32>
    %73 = vector.broadcast %63 : vector<2x1x128xf32> to vector<2x4x128xf32>
    %74 = vector.broadcast %69 : vector<1x4x128xf32> to vector<2x4x128xf32>
    %75 = arith.mulf %73, %74 : vector<2x4x128xf32>
    %76 = arith.subf %72, %75 : vector<2x4x128xf32>
    %77 = arith.addf %49, %76 : vector<2x4x128xf32>
    %78 = vector.broadcast %60 : vector<2x1x128xf32> to vector<2x4x128xf32>
    %79 = vector.broadcast %69 : vector<1x4x128xf32> to vector<2x4x128xf32>
    %80 = arith.mulf %78, %79 : vector<2x4x128xf32>
    %81 = vector.broadcast %63 : vector<2x1x128xf32> to vector<2x4x128xf32>
    %82 = vector.broadcast %66 : vector<1x4x128xf32> to vector<2x4x128xf32>
    %83 = arith.mulf %81, %82 : vector<2x4x128xf32>
    %84 = arith.addf %80, %83 : vector<2x4x128xf32>
    %85 = arith.addf %57, %84 : vector<2x4x128xf32>
    %c3 = arith.constant 3 : index
    %c0_34 = arith.constant 0 : index
    %c0_35 = arith.constant 0 : index
    %86 = vector.load %arg3[%c3, %c0_34, %c0_35] : memref<4x2x128xf32, #tpu.memory_space<vmem>>, vector<1x2x128xf32>
    %87 = vector.shape_cast %86 : vector<1x2x128xf32> to vector<2x128xf32>
    %88 = vector.shape_cast %87 : vector<2x128xf32> to vector<2x1x128xf32>
    %c3_36 = arith.constant 3 : index
    %c0_37 = arith.constant 0 : index
    %c0_38 = arith.constant 0 : index
    %89 = vector.load %arg4[%c3_36, %c0_37, %c0_38] : memref<4x2x128xf32, #tpu.memory_space<vmem>>, vector<1x2x128xf32>
    %90 = vector.shape_cast %89 : vector<1x2x128xf32> to vector<2x128xf32>
    %91 = vector.shape_cast %90 : vector<2x128xf32> to vector<2x1x128xf32>
    %c3_39 = arith.constant 3 : index
    %c0_40 = arith.constant 0 : index
    %c0_41 = arith.constant 0 : index
    %92 = vector.load %arg5[%c3_39, %c0_40, %c0_41] : memref<4x4x128xf32, #tpu.memory_space<vmem>>, vector<1x4x128xf32>
    %93 = vector.shape_cast %92 : vector<1x4x128xf32> to vector<4x128xf32>
    %94 = vector.shape_cast %93 : vector<4x128xf32> to vector<1x4x128xf32>
    %c3_42 = arith.constant 3 : index
    %c0_43 = arith.constant 0 : index
    %c0_44 = arith.constant 0 : index
    %95 = vector.load %arg6[%c3_42, %c0_43, %c0_44] : memref<4x4x128xf32, #tpu.memory_space<vmem>>, vector<1x4x128xf32>
    %96 = vector.shape_cast %95 : vector<1x4x128xf32> to vector<4x128xf32>
    %97 = vector.shape_cast %96 : vector<4x128xf32> to vector<1x4x128xf32>
    %98 = vector.broadcast %88 : vector<2x1x128xf32> to vector<2x4x128xf32>
    %99 = vector.broadcast %94 : vector<1x4x128xf32> to vector<2x4x128xf32>
    %100 = arith.mulf %98, %99 : vector<2x4x128xf32>
    %101 = vector.broadcast %91 : vector<2x1x128xf32> to vector<2x4x128xf32>
    %102 = vector.broadcast %97 : vector<1x4x128xf32> to vector<2x4x128xf32>
    %103 = arith.mulf %101, %102 : vector<2x4x128xf32>
    %104 = arith.subf %100, %103 : vector<2x4x128xf32>
    %105 = arith.addf %77, %104 : vector<2x4x128xf32>
    %106 = vector.broadcast %88 : vector<2x1x128xf32> to vector<2x4x128xf32>
    %107 = vector.broadcast %97 : vector<1x4x128xf32> to vector<2x4x128xf32>
    %108 = arith.mulf %106, %107 : vector<2x4x128xf32>
    %109 = vector.broadcast %91 : vector<2x1x128xf32> to vector<2x4x128xf32>
    %110 = vector.broadcast %94 : vector<1x4x128xf32> to vector<2x4x128xf32>
    %111 = arith.mulf %109, %110 : vector<2x4x128xf32>
    %112 = arith.addf %108, %111 : vector<2x4x128xf32>
    %113 = arith.addf %85, %112 : vector<2x4x128xf32>
    %c0_i32 = arith.constant 0 : i32
    %114 = arith.cmpi eq, %arg2, %c0_i32 : i32
    %115 = arith.extui %114 : i1 to i32
    %c0_i32_45 = arith.constant 0 : i32
    %116 = arith.cmpi ne, %115, %c0_i32_45 : i32
    scf.if %116 {
      %c0_48 = arith.constant 0 : index
      %c0_49 = arith.constant 0 : index
      %c0_50 = arith.constant 0 : index
      %120 = vector.load %arg7[%c0_48, %c0_49, %c0_50] : memref<2x4x128xf32, #tpu.memory_space<vmem>>, vector<2x4x128xf32>
      tpu.vector_store %arg7[%c0_48, %c0_49, %c0_50], %105 {strides = array<i32>} : memref<2x4x128xf32, #tpu.memory_space<vmem>>, vector<2x4x128xf32>,
      %c0_51 = arith.constant 0 : index
      %c0_52 = arith.constant 0 : index
      %c0_53 = arith.constant 0 : index
      %121 = vector.load %arg8[%c0_51, %c0_52, %c0_53] : memref<2x4x128xf32, #tpu.memory_space<vmem>>, vector<2x4x128xf32>
      tpu.vector_store %arg8[%c0_51, %c0_52, %c0_53], %113 {strides = array<i32>} : memref<2x4x128xf32, #tpu.memory_space<vmem>>, vector<2x4x128xf32>,
    } else {
    }
    %c0_i32_46 = arith.constant 0 : i32
    %117 = arith.cmpi sgt, %arg2, %c0_i32_46 : i32
    %118 = arith.extui %117 : i1 to i32
    %c0_i32_47 = arith.constant 0 : i32
    %119 = arith.cmpi ne, %118, %c0_i32_47 : i32
    scf.if %119 {
      %c0_48 = arith.constant 0 : index
      %c0_49 = arith.constant 0 : index
      %c0_50 = arith.constant 0 : index
      %120 = vector.load %arg7[%c0_48, %c0_49, %c0_50] : memref<2x4x128xf32, #tpu.memory_space<vmem>>, vector<2x4x128xf32>
      %121 = arith.addf %120, %105 : vector<2x4x128xf32>
      %c0_51 = arith.constant 0 : index
      %c0_52 = arith.constant 0 : index
      %c0_53 = arith.constant 0 : index
      %122 = vector.load %arg7[%c0_51, %c0_52, %c0_53] : memref<2x4x128xf32, #tpu.memory_space<vmem>>, vector<2x4x128xf32>
      tpu.vector_store %arg7[%c0_51, %c0_52, %c0_53], %121 {strides = array<i32>} : memref<2x4x128xf32, #tpu.memory_space<vmem>>, vector<2x4x128xf32>,
      %c0_54 = arith.constant 0 : index
      %c0_55 = arith.constant 0 : index
      %c0_56 = arith.constant 0 : index
      %123 = vector.load %arg8[%c0_54, %c0_55, %c0_56] : memref<2x4x128xf32, #tpu.memory_space<vmem>>, vector<2x4x128xf32>
      %124 = arith.addf %123, %113 : vector<2x4x128xf32>
      %c0_57 = arith.constant 0 : index
      %c0_58 = arith.constant 0 : index
      %c0_59 = arith.constant 0 : index
      %125 = vector.load %arg8[%c0_57, %c0_58, %c0_59] : memref<2x4x128xf32, #tpu.memory_space<vmem>>, vector<2x4x128xf32>
      tpu.vector_store %arg8[%c0_57, %c0_58, %c0_59], %124 {strides = array<i32>} : memref<2x4x128xf32, #tpu.memory_space<vmem>>, vector<2x4x128xf32>,
    } else {
    }
    return
  }
  func.func @transform_0(%arg0: i32, %arg1: i32, %arg2: i32) -> (i32, i32, i32) {
    %c0_i32 = arith.constant 0 : i32
    %c0_i32_0 = arith.constant 0 : i32
    return %arg2, %arg0, %c0_i32 : i32, i32, i32
  }
  func.func @transform_1(%arg0: i32, %arg1: i32, %arg2: i32) -> (i32, i32, i32) {
    %c0_i32 = arith.constant 0 : i32
    %c0_i32_0 = arith.constant 0 : i32
    return %arg2, %arg0, %c0_i32 : i32, i32, i32
  }
  func.func @transform_2(%arg0: i32, %arg1: i32, %arg2: i32) -> (i32, i32, i32) {
    %c0_i32 = arith.constant 0 : i32
    %c0_i32_0 = arith.constant 0 : i32
    return %arg2, %arg1, %c0_i32 : i32, i32, i32
  }
  func.func @transform_3(%arg0: i32, %arg1: i32, %arg2: i32) -> (i32, i32, i32) {
    %c0_i32 = arith.constant 0 : i32
    %c0_i32_0 = arith.constant 0 : i32
    return %arg2, %arg1, %c0_i32 : i32, i32, i32
  }
  func.func @transform_4(%arg0: i32, %arg1: i32, %arg2: i32) -> (i32, i32, i32) {
    %c0_i32 = arith.constant 0 : i32
    %c0_i32_0 = arith.constant 0 : i32
    return %arg0, %arg1, %c0_i32 : i32, i32, i32
  }
  func.func @transform_5(%arg0: i32, %arg1: i32, %arg2: i32) -> (i32, i32, i32) {
    %c0_i32 = arith.constant 0 : i32
    %c0_i32_0 = arith.constant 0 : i32
    return %arg0, %arg1, %c0_i32 : i32, i32, i32
  }
}

</mosaic_0001>

<llo_original>
// kernel: custom-call
$region0: #{custom-call}
  %s0 = inlined_call_operand.hbm [shape: c64[4,4,6,6], index: 0, kind: input, shape index: {}]
  %s1 = inlined_call_operand.vmem [shape: f32[4,4,6,6], index: 1, kind: output, shape index: {}]
  $region1: #{custom-call} parent=0
    #allocation0 [shape = 's32[1]{0}', space=sflag, size = 0x4, scoped, tag = 'scoped memory for custom-call']
    %2 = vsyncpa [#allocation0], 0
    %s4 = sshll.u32 %s0, 4
    %s5 = int_to_ptr.hbm [resolvable:$true] %s4
    %s6 = sshll.u32 %s1, 4
    %s7 = int_to_ptr.vmem [resolvable:$true] %s6
    %9 = dma.hbm_to_vmem [thread:$0]  %s5, 1536, %s7, [#allocation0]
    %11 = dma.done [#allocation0], 1536
    %12 = vsyncpa [#allocation0], 1

// kernel: custom-call.1
$region0: #{custom-call.1}
  %s0 = inlined_call_operand.hbm [shape: c64[4,4,6,6], index: 0, kind: input, shape index: {}]
  %s1 = inlined_call_operand.vmem [shape: f32[4,4,6,6], index: 1, kind: output, shape index: {}]
  %s2 = scalar_lea.hbm %s0, 96
  $region1: #{custom-call.1} parent=0
    #allocation0 [shape = 's32[1]{0}', space=sflag, size = 0x4, scoped, tag = 'scoped memory for custom-call.1']
    %3 = vsyncpa [#allocation0], 0
    %s5 = sshll.u32 %s2, 4
    %s6 = int_to_ptr.hbm [resolvable:$true] %s5
    %s7 = sshll.u32 %s1, 4
    %s8 = int_to_ptr.vmem [resolvable:$true] %s7
    %10 = dma.hbm_to_vmem [thread:$0]  %s6, 1536, %s8, [#allocation0]
    %12 = dma.done [#allocation0], 1536
    %13 = vsyncpa [#allocation0], 1

// kernel: spectral_conv2d_fast.1
$region0: #{spectral_conv2d_fast.1}
  #allocation0 [shape = 'u32[]', space=smem, size = 0x4, offset = 0x4, fixed_abs, tag = 'smem constant byte address 0x4 - core index']
  #allocation1 [shape = 'u32[72,128]{1,0:T(1,128)}', space=vmem, size = 0x9000, scoped, tag = 'internal scratch']
  %s0 = inlined_call_operand.vmem [shape: f32[4,2,128], index: 0, kind: input, shape index: {}]
  %s1 = inlined_call_operand.vmem [shape: f32[4,2,128], index: 1, kind: input, shape index: {}]
  %s2 = inlined_call_operand.vmem [shape: f32[4,4,128], index: 2, kind: input, shape index: {}]
  %s3 = inlined_call_operand.vmem [shape: f32[4,4,128], index: 3, kind: input, shape index: {}]
  %s4 = inlined_call_operand.vmem [shape: f32[2,4,128], index: 4, kind: output, shape index: {0}]
  %s5 = inlined_call_operand.vmem [shape: f32[2,4,128], index: 5, kind: output, shape index: {1}]
  %6 = xla_tuple %s4, %s5
  %s7 = sld [smem:[#allocation0]]
  $region42: #{spectral_conv2d_fast.1} parent=0
    _
  %s9 = ssub.s32 1, %s7
  %s10 = scalar_select 0, %s9, %s7
  // Predicated region
  $region2: #{spectral_conv2d_fast.1} parent=0 // pred_check
    _
  $region3: #{spectral_conv2d_fast.1} parent=0 // pred_check_branch
    %12 = sbr.rel (0) target = $region5
  $region4: #{spectral_conv2d_fast.1} parent=0 // pred_region
    _
  $region5: #{spectral_conv2d_fast.1} parent=0 // pred_fallthru
    _
  // Predicated region
  $region6: #{spectral_conv2d_fast.1} parent=0 // pred_check
    _
  $region7: #{spectral_conv2d_fast.1} parent=0 // pred_check_branch
    %14 = sbr.rel (0) target = $region9
  $region8: #{spectral_conv2d_fast.1} parent=0 // pred_region
    _
  $region9: #{spectral_conv2d_fast.1} parent=0 // pred_fallthru
    _
  // Predicated region
  $region10: #{spectral_conv2d_fast.1} parent=0 // pred_check
    _
  $region11: #{spectral_conv2d_fast.1} parent=0 // pred_check_branch
    %16 = sbr.rel (0) target = $region13
  $region12: #{spectral_conv2d_fast.1} parent=0 // pred_region
    _
  $region13: #{spectral_conv2d_fast.1} parent=0 // pred_fallthru
    _
  // Predicated region
  $region14: #{spectral_conv2d_fast.1} parent=0 // pred_check
    _
  $region15: #{spectral_conv2d_fast.1} parent=0 // pred_check_branch
    %18 = sbr.rel (0) target = $region17
  $region16: #{spectral_conv2d_fast.1} parent=0 // pred_region
    _
  $region17: #{spectral_conv2d_fast.1} parent=0 // pred_fallthru
    _
  %v19 = vld [vmem:[%s0] sm:$0x3]
  %v21 = vrot.slane %v19, 1
  %v22 = vld [vmem:[%s1] sm:$0x3]
  %v24 = vrot.slane %v22, 1
  %v25 = vld [vmem:[%s2] sm:$0xf]
  %v26 = vld [vmem:[%s3] sm:$0xf]
  %v27 = vperm.slane %v19, 0
  %v28 = vperm.slane %v21, 0
  %v31 = vmul.f32 %v27, %v25
  %v32 = vmul.f32 %v28, %v25
  %v33 = vperm.slane %v22, 0
  %v34 = vperm.slane %v24, 0
  %v37 = vmul.f32 %v33, %v26
  %v38 = vmul.f32 %v34, %v26
  %v39 = vsub.f32 %v31, %v37
  %v40 = vsub.f32 %v32, %v38
  %v41 = vadd.f32 %v39, 0.0
  %v42 = vadd.f32 %v40, 0.0
  %v43 = vmul.f32 %v27, %v26
  %v44 = vmul.f32 %v28, %v26
  %v45 = vmul.f32 %v33, %v25
  %v46 = vmul.f32 %v34, %v25
  %v47 = vadd.f32 %v43, %v45
  %v48 = vadd.f32 %v44, %v46
  %v49 = vadd.f32 %v47, 0.0
  %v50 = vadd.f32 %v48, 0.0
  %s51 = scalar_lea.vmem %s0, 2
  %v52 = vld [vmem:[%s51] sm:$0x3]
  %v54 = vrot.slane %v52, 1
  %s55 = scalar_lea.vmem %s1, 2
  %v56 = vld [vmem:[%s55] sm:$0x3]
  %v58 = vrot.slane %v56, 1
  %s59 = scalar_lea.vmem %s2, 4
  %v60 = vld [vmem:[%s59] sm:$0xf]
  %s61 = scalar_lea.vmem %s3, 4
  %v62 = vld [vmem:[%s61] sm:$0xf]
  %v63 = vperm.slane %v52, 0
  %v64 = vperm.slane %v54, 0
  %v67 = vmul.f32 %v63, %v60
  %v68 = vmul.f32 %v64, %v60
  %v69 = vperm.slane %v56, 0
  %v70 = vperm.slane %v58, 0
  %v73 = vmul.f32 %v69, %v62
  %v74 = vmul.f32 %v70, %v62
  %v75 = vsub.f32 %v67, %v73
  %v76 = vsub.f32 %v68, %v74
  %v77 = vadd.f32 %v41, %v75
  %v78 = vadd.f32 %v42, %v76
  %v79 = vmul.f32 %v63, %v62
  %v80 = vmul.f32 %v64, %v62
  %v81 = vmul.f32 %v69, %v60
  %v82 = vmul.f32 %v70, %v60
  %v83 = vadd.f32 %v79, %v81
  %v84 = vadd.f32 %v80, %v82
  %v85 = vadd.f32 %v49, %v83
  %v86 = vadd.f32 %v50, %v84
  %s87 = scalar_lea.vmem %s0, 4
  %v88 = vld [vmem:[%s87] sm:$0x3]
  %v90 = vrot.slane %v88, 1
  %s91 = scalar_lea.vmem %s1, 4
  %v92 = vld [vmem:[%s91] sm:$0x3]
  %v94 = vrot.slane %v92, 1
  %s95 = scalar_lea.vmem %s2, 8
  %v96 = vld [vmem:[%s95] sm:$0xf]
  %s97 = scalar_lea.vmem %s3, 8
  %v98 = vld [vmem:[%s97] sm:$0xf]
  %v99 = vperm.slane %v88, 0
  %v100 = vperm.slane %v90, 0
  %v103 = vmul.f32 %v99, %v96
  %v104 = vmul.f32 %v100, %v96
  %v105 = vperm.slane %v92, 0
  %v106 = vperm.slane %v94, 0
  %v109 = vmul.f32 %v105, %v98
  %v110 = vmul.f32 %v106, %v98
  %v111 = vsub.f32 %v103, %v109
  %v112 = vsub.f32 %v104, %v110
  %v113 = vadd.f32 %v77, %v111
  %v114 = vadd.f32 %v78, %v112
  %v115 = vmul.f32 %v99, %v98
  %v116 = vmul.f32 %v100, %v98
  %v117 = vmul.f32 %v105, %v96
  %v118 = vmul.f32 %v106, %v96
  %v119 = vadd.f32 %v115, %v117
  %v120 = vadd.f32 %v116, %v118
  %v121 = vadd.f32 %v85, %v119
  %v122 = vadd.f32 %v86, %v120
  %s123 = scalar_lea.vmem %s0, 6
  %v124 = vld [vmem:[%s123] sm:$0x3]
  %v126 = vrot.slane %v124, 1
  %s127 = scalar_lea.vmem %s1, 6
  %v128 = vld [vmem:[%s127] sm:$0x3]
  %v130 = vrot.slane %v128, 1
  %s131 = scalar_lea.vmem %s2, 12
  %v132 = vld [vmem:[%s131] sm:$0xf]
  %s133 = scalar_lea.vmem %s3, 12
  %v134 = vld [vmem:[%s133] sm:$0xf]
  %v135 = vperm.slane %v124, 0
  %v136 = vperm.slane %v126, 0
  %v139 = vmul.f32 %v135, %v132
  %v140 = vmul.f32 %v136, %v132
  %v141 = vperm.slane %v128, 0
  %v142 = vperm.slane %v130, 0
  %v145 = vmul.f32 %v141, %v134
  %v146 = vmul.f32 %v142, %v134
  %v147 = vsub.f32 %v139, %v145
  %v148 = vsub.f32 %v140, %v146
  %v149 = vadd.f32 %v113, %v147
  %v150 = vadd.f32 %v114, %v148
  %v151 = vmul.f32 %v135, %v134
  %v152 = vmul.f32 %v136, %v134
  %v153 = vmul.f32 %v141, %v132
  %v154 = vmul.f32 %v142, %v132
  %v155 = vadd.f32 %v151, %v153
  %v156 = vadd.f32 %v152, %v154
  %v157 = vadd.f32 %v121, %v155
  %v158 = vadd.f32 %v122, %v156
  %p159 = scmp.eq.s32.totalorder 0, 0
  // Predicated region
  $region18: #{spectral_conv2d_fast.1} parent=0 // pred_check
    %p160 = pneg %p159
  $region19: #{spectral_conv2d_fast.1} parent=0 // pred_check_branch
    %162 = sbr.rel (%p160) target = $region21
  $region20: #{spectral_conv2d_fast.1} parent=0 // pred_region
    %163 = vst [vmem:[%s4] sm:$0xf] %v149
    %164 = vst [vmem:[%s4 + $0x4] sm:$0xf] %v150
    %165 = vst [vmem:[%s5] sm:$0xf] %v157
    %166 = vst [vmem:[%s5 + $0x4] sm:$0xf] %v158
  $region21: #{spectral_conv2d_fast.1} parent=0 // pred_fallthru
    _
  %p167 = scmp.gt.s32.totalorder 0, 0
  // Predicated region
  $region22: #{spectral_conv2d_fast.1} parent=0 // pred_check
    %p168 = pneg %p167
  $region23: #{spectral_conv2d_fast.1} parent=0 // pred_check_branch
    %170 = sbr.rel (%p168) target = $region25
  $region24: #{spectral_conv2d_fast.1} parent=0 // pred_region
    %v171 = vld [vmem:[%s4] sm:$0xf]
    %v172 = vld [vmem:[%s4 + $0x4] sm:$0xf]
    %v173 = vadd.f32 %v171, %v149
    %v174 = vadd.f32 %v172, %v150
    %175 = vst [vmem:[%s4] sm:$0xf] %v173
    %176 = vst [vmem:[%s4 + $0x4] sm:$0xf] %v174
    %v177 = vld [vmem:[%s5] sm:$0xf]
    %v178 = vld [vmem:[%s5 + $0x4] sm:$0xf]
    %v179 = vadd.f32 %v177, %v157
    %v180 = vadd.f32 %v178, %v158
    %181 = vst [vmem:[%s5] sm:$0xf] %v179
    %182 = vst [vmem:[%s5 + $0x4] sm:$0xf] %v180
  $region25: #{spectral_conv2d_fast.1} parent=0 // pred_fallthru
    _
  // Predicated region
  $region26: #{spectral_conv2d_fast.1} parent=0 // pred_check
    _
  $region27: #{spectral_conv2d_fast.1} parent=0 // pred_check_branch
    %184 = sbr.rel (0) target = $region29
  $region28: #{spectral_conv2d_fast.1} parent=0 // pred_region
    _
  $region29: #{spectral_conv2d_fast.1} parent=0 // pred_fallthru
    _
  // Predicated region
  $region30: #{spectral_conv2d_fast.1} parent=0 // pred_check
    _
  $region31: #{spectral_conv2d_fast.1} parent=0 // pred_check_branch
    %186 = sbr.rel (0) target = $region33
  $region32: #{spectral_conv2d_fast.1} parent=0 // pred_region
    _
  $region33: #{spectral_conv2d_fast.1} parent=0 // pred_fallthru
    _
  // Predicated region
  $region34: #{spectral_conv2d_fast.1} parent=0 // pred_check
    _
  $region35: #{spectral_conv2d_fast.1} parent=0 // pred_check_branch
    %188 = sbr.rel (0) target = $region37
  $region36: #{spectral_conv2d_fast.1} parent=0 // pred_region
    _
  $region37: #{spectral_conv2d_fast.1} parent=0 // pred_fallthru
    _
  // Predicated region
  $region38: #{spectral_conv2d_fast.1} parent=0 // pred_check
    _
  $region39: #{spectral_conv2d_fast.1} parent=0 // pred_check_branch
    %190 = sbr.rel (0) target = $region41
  $region40: #{spectral_conv2d_fast.1} parent=0 // pred_region
    _
  $region41: #{spectral_conv2d_fast.1} parent=0 // pred_fallthru
    _

// kernel: reverse.0
$region0: #{reverse.0}
  %s0 = inlined_call_operand.vmem [shape: f32[2,4,16,7], index: 0, kind: input, shape index: {}]
  %s1 = inlined_call_operand.vmem [shape: f32[2,4,16,7], index: 1, kind: output, shape index: {}]
  $region1: #{reverse.0} parent=0
    #allocation0 [shape = 'u8[65536]{0}', space=vmem, size = 0x10000, scoped, tag = 'operand span for operand 0']
    #allocation1 [shape = 'u8[32768]{0}', space=vmem, size = 0x8000, scoped, tag = 'operand span for operand 1']
    %s2 = scalar_lea.vmem [#allocation0], 8
    // Predicated region
    $region2: #{reverse.0} parent=1 // pred_check
      _
    $region3: #{reverse.0} parent=1 // pred_check_branch
      %4 = sbr.rel (0) target = $region5
    $region4: #{reverse.0} parent=1 // pred_region
      // Predicated region
      $region6: #{reverse.0} parent=4 // pred_check
        _
      $region7: #{reverse.0} parent=4 // pred_check_branch
        %6 = sbr.rel (0) target = $region9
      $region8: #{reverse.0} parent=4 // pred_region
        // Predicated region
        $region21: #{reverse.0} parent=8 // pred_check
          _
        $region22: #{reverse.0} parent=8 // pred_check_branch
          %36 = sbr.rel (0) target = $region24
        $region23: #{reverse.0} parent=8 // pred_region
          loop: start=0, step=1, limit=1
          $region25: #{reverse.0} parent=23 // loop_pre_header
            _
          $region26: #{reverse.0} parent=23 // loop_header
            %s38 = sphi 0, %s42
            %p39 = scmp.ge.s32.totalorder %s38, 1
            %s43 = sphi %s0, %s0
            %s44 = sphi %s2, %s2
          $region27: #{reverse.0} parent=23 // loop_header_branch
            %41 = sbr.rel (%p39) target = $region31
          $region28: #{reverse.0} parent=23 // loop_body
            %v45 = vld [vmem:[%s43] sm:$0xff]
            %46 = vst [vmem:[%s44] sm:$0xff] %v45
            %v47 = vld [vmem:[%s43 + $0x8] sm:$0xff]
            %48 = vst [vmem:[%s44 + $0x10] sm:$0xff] %v47
            %v49 = vld [vmem:[%s43 + $0x10] sm:$0xff]
            %50 = vst [vmem:[%s44 + $0x20] sm:$0xff] %v49
            %v51 = vld [vmem:[%s43 + $0x18] sm:$0xff]
            %52 = vst [vmem:[%s44 + $0x30] sm:$0xff] %v51
            %v53 = vld [vmem:[%s43 + $0x20] sm:$0xff]
            %54 = vst [vmem:[%s44 + $0x40] sm:$0xff] %v53
            %v55 = vld [vmem:[%s43 + $0x28] sm:$0xff]
            %56 = vst [vmem:[%s44 + $0x50] sm:$0xff] %v55
            %v57 = vld [vmem:[%s43 + $0x30] sm:$0xff]
            %58 = vst [vmem:[%s44 + $0x60] sm:$0xff] %v57
            %v59 = vld [vmem:[%s43 + $0x38] sm:$0xff]
            %60 = vst [vmem:[%s44 + $0x70] sm:$0xff] %v59
          $region29: #{reverse.0} parent=23 // loop_footer
            %s42 = sadd.s32 1, %s38
          $region30: #{reverse.0} parent=23 // loop_footer_branch
            %37 = sbr.rel target = $region26
          $region31: #{reverse.0} parent=23 // loop_exit
            _
        $region24: #{reverse.0} parent=8 // pred_fallthru
          _
        // Predicated region
        $region32: #{reverse.0} parent=8 // pred_check
          _
        $region33: #{reverse.0} parent=8 // pred_check_branch
          %62 = sbr.rel target = $region35
        $region34: #{reverse.0} parent=8 // pred_region
          _
        $region35: #{reverse.0} parent=8 // pred_fallthru
          _
      $region9: #{reverse.0} parent=4 // pred_fallthru
        _
      // Predicated region
      $region10: #{reverse.0} parent=4 // pred_check
        _
      $region11: #{reverse.0} parent=4 // pred_check_branch
        %8 = sbr.rel target = $region13
      $region12: #{reverse.0} parent=4 // pred_region
        %s10 = ssub.s32 256, 1
        loop: start=0, step=1, limit=1
        $region14: #{reverse.0} parent=12 // loop_pre_header
          _
        $region15: #{reverse.0} parent=12 // loop_header
          %s12 = sphi 0, %s16
          %p13 = scmp.ge.s32.totalorder %s12, 1
          %s17 = sphi %s0, %s0
          %s18 = sphi %s2, %s2
        $region16: #{reverse.0} parent=12 // loop_header_branch
          %15 = sbr.rel (%p13) target = $region20
        $region17: #{reverse.0} parent=12 // loop_body
          %v19 = vld [vmem:[%s17] sm:%s10]
          %20 = vst [vmem:[%s18] sm:%s10] %v19
          %v21 = vld [vmem:[%s17 + $0x8] sm:%s10]
          %22 = vst [vmem:[%s18 + $0x10] sm:%s10] %v21
          %v23 = vld [vmem:[%s17 + $0x10] sm:%s10]
          %24 = vst [vmem:[%s18 + $0x20] sm:%s10] %v23
          %v25 = vld [vmem:[%s17 + $0x18] sm:%s10]
          %26 = vst [vmem:[%s18 + $0x30] sm:%s10] %v25
          %v27 = vld [vmem:[%s17 + $0x20] sm:%s10]
          %28 = vst [vmem:[%s18 + $0x40] sm:%s10] %v27
          %v29 = vld [vmem:[%s17 + $0x28] sm:%s10]
          %30 = vst [vmem:[%s18 + $0x50] sm:%s10] %v29
          %v31 = vld [vmem:[%s17 + $0x30] sm:%s10]
          %32 = vst [vmem:[%s18 + $0x60] sm:%s10] %v31
          %v33 = vld [vmem:[%s17 + $0x38] sm:%s10]
          %34 = vst [vmem:[%s18 + $0x70] sm:%s10] %v33
        $region18: #{reverse.0} parent=12 // loop_footer
          %s16 = sadd.s32 1, %s12
        $region19: #{reverse.0} parent=12 // loop_footer_branch
          %11 = sbr.rel target = $region15
        $region20: #{reverse.0} parent=12 // loop_exit
          _
      $region13: #{reverse.0} parent=4 // pred_fallthru
        _
    $region5: #{reverse.0} parent=1 // pred_fallthru
      _
    %63 = vnop
    %s64 = scalar_lea.vmem [#allocation0], 7
    %v65 = vld [vmem:[%s64] ss:$-1 sm:$0xff]
    %v66 = vrot.slane %v65, 1
    %67 = vst [vmem:[#allocation1] sm:$0xff] %v66
    %s68 = scalar_lea.vmem [#allocation0], 8
    %s69 = scalar_lea.vmem %s68, 7 [#allocation0]
    %v70 = vld [vmem:[%s69] ss:$-1 sm:$0xff]
    %v71 = vrot.slane %v70, 1
    %v72 = vlaneseq
    %v73 = vshrl.u32 %v72, 7
    %vm74 = vcmp.lt.s32.totalorder %v73, 7
    %75 = vst.msk [vmem:[#allocation1] sm:$0xff] %vm74, %v71
    %s76 = scalar_lea.vmem [#allocation1], 8
    %s77 = scalar_lea.vmem [#allocation0], 16
    %s78 = scalar_lea.vmem %s77, 7 [#allocation0]
    %v79 = vld [vmem:[%s78] ss:$-1 sm:$0xff]
    %v80 = vrot.slane %v79, 1
    %81 = vst [vmem:[%s76] sm:$0xff] %v80
    %s82 = scalar_lea.vmem %s77, 8 [#allocation0]
    %s83 = scalar_lea.vmem %s82, 7 [#allocation0]
    %v84 = vld [vmem:[%s83] ss:$-1 sm:$0xff]
    %v85 = vrot.slane %v84, 1
    %v86 = vlaneseq
    %v87 = vshrl.u32 %v86, 7
    %vm88 = vcmp.lt.s32.totalorder %v87, 7
    %89 = vst.msk [vmem:[%s76] sm:$0xff] %vm88, %v85
    %s90 = scalar_lea.vmem [#allocation1], 16
    %s91 = scalar_lea.vmem [#allocation0], 32
    %s92 = scalar_lea.vmem %s91, 7 [#allocation0]
    %v93 = vld [vmem:[%s92] ss:$-1 sm:$0xff]
    %v94 = vrot.slane %v93, 1
    %95 = vst [vmem:[%s90] sm:$0xff] %v94
    %s96 = scalar_lea.vmem %s91, 8 [#allocation0]
    %s97 = scalar_lea.vmem %s96, 7 [#allocation0]
    %v98 = vld [vmem:[%s97] ss:$-1 sm:$0xff]
    %v99 = vrot.slane %v98, 1
    %v100 = vlaneseq
    %v101 = vshrl.u32 %v100, 7
    %vm102 = vcmp.lt.s32.totalorder %v101, 7
    %103 = vst.msk [vmem:[%s90] sm:$0xff] %vm102, %v99
    %s104 = scalar_lea.vmem [#allocation1], 24
    %s105 = scalar_lea.vmem [#allocation0], 48
    %s106 = scalar_lea.vmem %s105, 7 [#allocation0]
    %v107 = vld [vmem:[%s106] ss:$-1 sm:$0xff]
    %v108 = vrot.slane %v107, 1
    %109 = vst [vmem:[%s104] sm:$0xff] %v108
    %s110 = scalar_lea.vmem %s105, 8 [#allocation0]
    %s111 = scalar_lea.vmem %s110, 7 [#allocation0]
    %v112 = vld [vmem:[%s111] ss:$-1 sm:$0xff]
    %v113 = vrot.slane %v112, 1
    %v114 = vlaneseq
    %v115 = vshrl.u32 %v114, 7
    %vm116 = vcmp.lt.s32.totalorder %v115, 7
    %117 = vst.msk [vmem:[%s104] sm:$0xff] %vm116, %v113
    %s118 = scalar_lea.vmem [#allocation1], 32
    %s119 = scalar_lea.vmem [#allocation0], 64
    %s120 = scalar_lea.vmem %s119, 7 [#allocation0]
    %v121 = vld [vmem:[%s120] ss:$-1 sm:$0xff]
    %v122 = vrot.slane %v121, 1
    %123 = vst [vmem:[%s118] sm:$0xff] %v122
    %s124 = scalar_lea.vmem %s119, 8 [#allocation0]
    %s125 = scalar_lea.vmem %s124, 7 [#allocation0]
    %v126 = vld [vmem:[%s125] ss:$-1 sm:$0xff]
    %v127 = vrot.slane %v126, 1
    %v128 = vlaneseq
    %v129 = vshrl.u32 %v128, 7
    %vm130 = vcmp.lt.s32.totalorder %v129, 7
    %131 = vst.msk [vmem:[%s118] sm:$0xff] %vm130, %v127
    %s132 = scalar_lea.vmem [#allocation1], 40
    %s133 = scalar_lea.vmem [#allocation0], 80
    %s134 = scalar_lea.vmem %s133, 7 [#allocation0]
    %v135 = vld [vmem:[%s134] ss:$-1 sm:$0xff]
    %v136 = vrot.slane %v135, 1
    %137 = vst [vmem:[%s132] sm:$0xff] %v136
    %s138 = scalar_lea.vmem %s133, 8 [#allocation0]
    %s139 = scalar_lea.vmem %s138, 7 [#allocation0]
    %v140 = vld [vmem:[%s139] ss:$-1 sm:$0xff]
    %v141 = vrot.slane %v140, 1
    %v142 = vlaneseq
    %v143 = vshrl.u32 %v142, 7
    %vm144 = vcmp.lt.s32.totalorder %v143, 7
    %145 = vst.msk [vmem:[%s132] sm:$0xff] %vm144, %v141
    %s146 = scalar_lea.vmem [#allocation1], 48
    %s147 = scalar_lea.vmem [#allocation0], 96
    %s148 = scalar_lea.vmem %s147, 7 [#allocation0]
    %v149 = vld [vmem:[%s148] ss:$-1 sm:$0xff]
    %v150 = vrot.slane %v149, 1
    %151 = vst [vmem:[%s146] sm:$0xff] %v150
    %s152 = scalar_lea.vmem %s147, 8 [#allocation0]
    %s153 = scalar_lea.vmem %s152, 7 [#allocation0]
    %v154 = vld [vmem:[%s153] ss:$-1 sm:$0xff]
    %v155 = vrot.slane %v154, 1
    %v156 = vlaneseq
    %v157 = vshrl.u32 %v156, 7
    %vm158 = vcmp.lt.s32.totalorder %v157, 7
    %159 = vst.msk [vmem:[%s146] sm:$0xff] %vm158, %v155
    %s160 = scalar_lea.vmem [#allocation1], 56
    %s161 = scalar_lea.vmem [#allocation0], 112
    %s162 = scalar_lea.vmem %s161, 7 [#allocation0]
    %v163 = vld [vmem:[%s162] ss:$-1 sm:$0xff]
    %v164 = vrot.slane %v163, 1
    %165 = vst [vmem:[%s160] sm:$0xff] %v164
    %s166 = scalar_lea.vmem %s161, 8 [#allocation0]
    %s167 = scalar_lea.vmem %s166, 7 [#allocation0]
    %v168 = vld [vmem:[%s167] ss:$-1 sm:$0xff]
    %v169 = vrot.slane %v168, 1
    %v170 = vlaneseq
    %v171 = vshrl.u32 %v170, 7
    %vm172 = vcmp.lt.s32.totalorder %v171, 7
    %173 = vst.msk [vmem:[%s160] sm:$0xff] %vm172, %v169
    // Predicated region
    $region36: #{reverse.0} parent=1 // pred_check
      _
    $region37: #{reverse.0} parent=1 // pred_check_branch
      %175 = sbr.rel (0) target = $region39
    $region38: #{reverse.0} parent=1 // pred_region
      // Predicated region
      $region40: #{reverse.0} parent=38 // pred_check
        _
      $region41: #{reverse.0} parent=38 // pred_check_branch
        %177 = sbr.rel (0) target = $region43
      $region42: #{reverse.0} parent=38 // pred_region
        // Predicated region
        $region55: #{reverse.0} parent=42 // pred_check
          _
        $region56: #{reverse.0} parent=42 // pred_check_branch
          %207 = sbr.rel (0) target = $region58
        $region57: #{reverse.0} parent=42 // pred_region
          loop: start=0, step=1, limit=1
          $region59: #{reverse.0} parent=57 // loop_pre_header
            _
          $region60: #{reverse.0} parent=57 // loop_header
            %s209 = sphi 0, %s213
            %p210 = scmp.ge.s32.totalorder %s209, 1
            %s214 = sphi [#allocation1], [#allocation1]
            %s215 = sphi %s1, %s1
          $region61: #{reverse.0} parent=57 // loop_header_branch
            %212 = sbr.rel (%p210) target = $region65
          $region62: #{reverse.0} parent=57 // loop_body
            %v216 = vld [vmem:[%s214] sm:$0xff]
            %217 = vst [vmem:[%s215] sm:$0xff] %v216
            %v218 = vld [vmem:[%s214 + $0x8] sm:$0xff]
            %219 = vst [vmem:[%s215 + $0x8] sm:$0xff] %v218
            %v220 = vld [vmem:[%s214 + $0x10] sm:$0xff]
            %221 = vst [vmem:[%s215 + $0x10] sm:$0xff] %v220
            %v222 = vld [vmem:[%s214 + $0x18] sm:$0xff]
            %223 = vst [vmem:[%s215 + $0x18] sm:$0xff] %v222
            %v224 = vld [vmem:[%s214 + $0x20] sm:$0xff]
            %225 = vst [vmem:[%s215 + $0x20] sm:$0xff] %v224
            %v226 = vld [vmem:[%s214 + $0x28] sm:$0xff]
            %227 = vst [vmem:[%s215 + $0x28] sm:$0xff] %v226
            %v228 = vld [vmem:[%s214 + $0x30] sm:$0xff]
            %229 = vst [vmem:[%s215 + $0x30] sm:$0xff] %v228
            %v230 = vld [vmem:[%s214 + $0x38] sm:$0xff]
            %231 = vst [vmem:[%s215 + $0x38] sm:$0xff] %v230
          $region63: #{reverse.0} parent=57 // loop_footer
            %s213 = sadd.s32 1, %s209
          $region64: #{reverse.0} parent=57 // loop_footer_branch
            %208 = sbr.rel target = $region60
          $region65: #{reverse.0} parent=57 // loop_exit
            _
        $region58: #{reverse.0} parent=42 // pred_fallthru
          _
        // Predicated region
        $region66: #{reverse.0} parent=42 // pred_check
          _
        $region67: #{reverse.0} parent=42 // pred_check_branch
          %233 = sbr.rel target = $region69
        $region68: #{reverse.0} parent=42 // pred_region
          _
        $region69: #{reverse.0} parent=42 // pred_fallthru
          _
      $region43: #{reverse.0} parent=38 // pred_fallthru
        _
      // Predicated region
      $region44: #{reverse.0} parent=38 // pred_check
        _
      $region45: #{reverse.0} parent=38 // pred_check_branch
        %179 = sbr.rel target = $region47
      $region46: #{reverse.0} parent=38 // pred_region
        %s181 = ssub.s32 256, 1
        loop: start=0, step=1, limit=1
        $region48: #{reverse.0} parent=46 // loop_pre_header
          _
        $region49: #{reverse.0} parent=46 // loop_header
          %s183 = sphi 0, %s187
          %p184 = scmp.ge.s32.totalorder %s183, 1
          %s188 = sphi [#allocation1], [#allocation1]
          %s189 = sphi %s1, %s1
        $region50: #{reverse.0} parent=46 // loop_header_branch
          %186 = sbr.rel (%p184) target = $region54
        $region51: #{reverse.0} parent=46 // loop_body
          %v190 = vld [vmem:[%s188] sm:%s181]
          %191 = vst [vmem:[%s189] sm:%s181] %v190
          %v192 = vld [vmem:[%s188 + $0x8] sm:%s181]
          %193 = vst [vmem:[%s189 + $0x8] sm:%s181] %v192
          %v194 = vld [vmem:[%s188 + $0x10] sm:%s181]
          %195 = vst [vmem:[%s189 + $0x10] sm:%s181] %v194
          %v196 = vld [vmem:[%s188 + $0x18] sm:%s181]
          %197 = vst [vmem:[%s189 + $0x18] sm:%s181] %v196
          %v198 = vld [vmem:[%s188 + $0x20] sm:%s181]
          %199 = vst [vmem:[%s189 + $0x20] sm:%s181] %v198
          %v200 = vld [vmem:[%s188 + $0x28] sm:%s181]
          %201 = vst [vmem:[%s189 + $0x28] sm:%s181] %v200
          %v202 = vld [vmem:[%s188 + $0x30] sm:%s181]
          %203 = vst [vmem:[%s189 + $0x30] sm:%s181] %v202
          %v204 = vld [vmem:[%s188 + $0x38] sm:%s181]
          %205 = vst [vmem:[%s189 + $0x38] sm:%s181] %v204
        $region52: #{reverse.0} parent=46 // loop_footer
          %s187 = sadd.s32 1, %s183
        $region53: #{reverse.0} parent=46 // loop_footer_branch
          %182 = sbr.rel target = $region49
        $region54: #{reverse.0} parent=46 // loop_exit
          _
      $region47: #{reverse.0} parent=38 // pred_fallthru
        _
    $region39: #{reverse.0} parent=1 // pred_fallthru
      _
    %234 = vnop

</llo_original>
